<compile_context>
chip_gen: v6e
topology: v6e:2x2x1
jax: 0.10.0
libtpu: 0.0.40
codegen_flags: <defaults>
</compile_context>

<pallas_src>
import jax
import jax.numpy as jnp
from jax import lax
from jax.experimental import pallas as pl
from jax.experimental.pallas import tpu as pltpu

# Small, module-consistent shapes.
N, H, W = 2, 16, 16          # batch, spatial
IN_C = 1                     # input channels before Expand
EXP_C = 3                    # channels after Expand(-1, 3, -1, -1)
F = 32                       # num_backbone_features
C = 8                        # task_description.classes
KH = KW = 3                  # conv kernel size
HW = H * W                   # 256  (multiple of 128 -> lane-tile aligned)
KFLAT = KH * KW              # 9    (Expand folded into the conv weight)


def classifier_kernel(patches_ref, cw_ref, hw_ref, out_ref):
    """patches: (KFLAT+1, N*HW)  cw: (F, KFLAT+1)  hw: (C, F+1)  out: (C, N)."""
    n = out_ref.shape[1]                       # batch size (static)
    hw_pix = patches_ref.shape[1] // n         # pixels per image = H*W
    f = hw_ref.shape[1] - 1                    # num_backbone_features

    # Conv (+ bias via the ones row / bias column) as one MXU matmul over the
    # whole batch, then ReLU on the VPU:  (F, K+1) @ (K+1, N*HW) -> (F, N*HW).
    conv = jnp.maximum(
        jnp.dot(cw_ref[...], patches_ref[...],
                preferred_element_type=jnp.float32),
        0.0)

    w_aug = hw_ref[...]                        # (C, F+1) = [head_w | head_b]
    wf = w_aug[:, :f]                          # (C, F)
    wb = w_aug[:, f:]                          # (C, 1)
    inv_hw = 1.0 / hw_pix

    # Global average pool per image: static lane-tile-aligned slices (no
    # relayout), XLU cross-lane reduce, 1/HW scale; then the tiny head matmul
    # per batch column (bias folded in wb).
    for i in range(n):
        feat_col = jnp.sum(conv[:, i * hw_pix:(i + 1) * hw_pix],
                           axis=1, keepdims=True) * inv_hw        # (F, 1)
        out_ref[:, i:i + 1] = (
            jnp.dot(wf, feat_col, preferred_element_type=jnp.float32) + wb)


def prepare_params(conv_w, conv_b, head_w, head_b):
    """Parameter-only preprocessing, run once at param-load time.

    Folds Expand(-1,3,-1,-1) into the conv weight (sum over in-channels) and
    folds both biases into their weight matrices so the kernel needs only 3
    inputs / 3 DMAs.
    """
    f = conv_w.shape[0]
    cw = jnp.sum(conv_w, axis=1).reshape(f, -1)                    # (F, 9)
    cw_aug = jnp.concatenate([cw, conv_b[:, None]], axis=1)        # (F, 10)
    hw_aug = jnp.concatenate([head_w, head_b[:, None]], axis=1)    # (C, F+1)
    return cw_aug, hw_aug


def simple_classifier_forward(x, cw_aug, hw_aug):
    """x: (N, 1, H, W) f32. Returns logits (N, C) f32."""
    n, _, h, w = x.shape
    nhw = n * h * w
    num_classes = hw_aug.shape[0]

    # im2col in one XLA op ('SAME' 3x3, single input channel): (N, 9, H, W).
    patches = lax.conv_general_dilated_patches(
        x, filter_shape=(KH, KW), window_strides=(1, 1), padding="SAME",
        dimension_numbers=("NCHW", "OIHW", "NCHW"))
    # Lane-dense (9, N*H*W) slab; column index = b*H*W + i*W + j (matches the
    # per-image lane slices used for GAP inside the kernel).
    patches = patches.transpose(1, 0, 2, 3).reshape(KH * KW, nhw)
    # Ones row folds the conv bias into the conv matmul (K: 9 -> 10).
    patches_aug = jnp.concatenate(
        [patches, jnp.ones((1, nhw), patches.dtype)], axis=0)

    logits_t = pl.pallas_call(
        classifier_kernel,
        out_shape=jax.ShapeDtypeStruct((num_classes, n), jnp.float32),
        in_specs=[
            pl.BlockSpec(memory_space=pltpu.MemorySpace.VMEM),   # patches_aug
            pl.BlockSpec(memory_space=pltpu.MemorySpace.VMEM),   # conv weight
            pl.BlockSpec(memory_space=pltpu.MemorySpace.VMEM),   # head weight
        ],
        out_specs=pl.BlockSpec(memory_space=pltpu.MemorySpace.VMEM),
    )(patches_aug, cw_aug, hw_aug)

    return logits_t.T                                             # (N, C)


def reference_forward(x, conv_w, conv_b, head_w, head_b):
    """Pure-JAX reference mirroring the PyTorch forward."""
    n = x.shape[0]
    xe = jnp.broadcast_to(x, (n, EXP_C, H, W))                    # Expand
    y = lax.conv_general_dilated(
        xe, conv_w, window_strides=(1, 1), padding="SAME",
        dimension_numbers=("NCHW", "OIHW", "NCHW"))
    y = y + conv_b.reshape(1, F, 1, 1)
    y = jnp.maximum(y, 0.0)
    feat = jnp.mean(y, axis=(2, 3))                               # (N, F)
    return feat @ head_w.T + head_b                               # (N, C)


if __name__ == "__main__":
    key = jax.random.PRNGKey(0)
    kx, kcw, kcb, khw, khb = jax.random.split(key, 5)

    x = jax.random.normal(kx, (N, IN_C, H, W), jnp.float32)

    # Deterministic kaiming-normal style init (fan_in based), small biases so
    # the bias-folding path is actually exercised.
    conv_fan_in = EXP_C * KH * KW
    conv_w = jax.random.normal(kcw, (F, EXP_C, KH, KW), jnp.float32) * jnp.sqrt(
        2.0 / conv_fan_in)
    conv_b = 0.1 * jax.random.normal(kcb, (F,), jnp.float32)
    head_w = jax.random.normal(khw, (C, F), jnp.float32) * jnp.sqrt(2.0 / F)
    head_b = 0.1 * jax.random.normal(khb, (C,), jnp.float32)

    # Parameter-only preprocessing hoisted out of the per-call path.
    cw_aug, hw_aug = jax.block_until_ready(
        prepare_params(conv_w, conv_b, head_w, head_b))

    fwd = jax.jit(simple_classifier_forward)
    logits = fwd(x, cw_aug, hw_aug)
    jax.block_until_ready(logits)

    ref = reference_forward(x, conv_w, conv_b, head_w, head_b)
    assert logits.shape == (N, C)
    assert jnp.allclose(logits, ref, atol=1e-4, rtol=1e-4), (logits, ref)

    print("KERNEL_OK")
</pallas_src>

<mosaic_0001>
module attributes {stable_mosaic.version = 11 : i64} {
  func.func @classifier_kernel(%arg0: memref<10x512xf32, #tpu.memory_space<vmem>>, %arg1: memref<32x10xf32, #tpu.memory_space<vmem>>, %arg2: memref<8x33xf32, #tpu.memory_space<vmem>>, %arg3: memref<8x2xf32, #tpu.memory_space<vmem>>) attributes {dimension_semantics = [], scalar_prefetch = 0 : i64, scratch_operands = 0 : i64, tpu.core_type = #tpu.core_type<tc>} {
    %c0 = arith.constant 0 : index
    %c0_0 = arith.constant 0 : index
    %0 = vector.load %arg1[%c0, %c0_0] : memref<32x10xf32, #tpu.memory_space<vmem>>, vector<32x10xf32>
    %c0_1 = arith.constant 0 : index
    %c0_2 = arith.constant 0 : index
    %1 = vector.load %arg0[%c0_1, %c0_2] : memref<10x512xf32, #tpu.memory_space<vmem>>, vector<10x512xf32>
    %cst = arith.constant dense<0.000000e+00> : vector<32x512xf32>
    %2 = tpu.matmul %0, %1, %cst {dimension_numbers = #tpu.dot_dimension_numbers<[1], [0], [0], [1], [0, 0, 1, 1], [], []>} : vector<32x10xf32>, vector<10x512xf32>, vector<32x512xf32> -> vector<32x512xf32>
    %cst_3 = arith.constant 0.000000e+00 : f32
    %3 = vector.broadcast %cst_3 : f32 to vector<32x512xf32>
    %4 = arith.maximumf %2, %3 : vector<32x512xf32>
    %c0_4 = arith.constant 0 : index
    %c0_5 = arith.constant 0 : index
    %5 = vector.load %arg2[%c0_4, %c0_5] : memref<8x33xf32, #tpu.memory_space<vmem>>, vector<8x33xf32>
    %6 = vector.extract_strided_slice %5 {offsets = [0, 0], sizes = [8, 32], strides = [1, 1]} : vector<8x33xf32> to vector<8x32xf32>
    %7 = vector.extract_strided_slice %5 {offsets = [0, 32], sizes = [8, 1], strides = [1, 1]} : vector<8x33xf32> to vector<8x1xf32>
    %8 = vector.extract_strided_slice %4 {offsets = [0, 0], sizes = [32, 256], strides = [1, 1]} : vector<32x512xf32> to vector<32x256xf32>
    %cst_6 = arith.constant dense<0.000000e+00> : vector<32xf32>
    %9 = vector.multi_reduction <add>, %8, %cst_6 [1] : vector<32x256xf32> to vector<32xf32>
    %10 = vector.shape_cast %9 : vector<32xf32> to vector<32x1xf32>
    %cst_7 = arith.constant 3.906250e-03 : f32
    %11 = vector.broadcast %cst_7 : f32 to vector<32x1xf32>
    %12 = arith.mulf %10, %11 : vector<32x1xf32>
    %cst_8 = arith.constant dense<0.000000e+00> : vector<8x1xf32>
    %13 = tpu.matmul %6, %12, %cst_8 {dimension_numbers = #tpu.dot_dimension_numbers<[1], [0], [0], [1], [0, 0, 1, 1], [], []>} : vector<8x32xf32>, vector<32x1xf32>, vector<8x1xf32> -> vector<8x1xf32>
    %14 = arith.addf %13, %7 : vector<8x1xf32>
    %c0_9 = arith.constant 0 : index
    %c0_10 = arith.constant 0 : index
    %15 = vector.load %arg3[%c0_9, %c0_10] : memref<8x2xf32, #tpu.memory_space<vmem>>, vector<8x1xf32>
    tpu.vector_store %arg3[%c0_9, %c0_10], %14 {strides = array<i32>} : memref<8x2xf32, #tpu.memory_space<vmem>>, vector<8x1xf32>,
    %16 = vector.extract_strided_slice %4 {offsets = [0, 256], sizes = [32, 256], strides = [1, 1]} : vector<32x512xf32> to vector<32x256xf32>
    %cst_11 = arith.constant dense<0.000000e+00> : vector<32xf32>
    %17 = vector.multi_reduction <add>, %16, %cst_11 [1] : vector<32x256xf32> to vector<32xf32>
    %18 = vector.shape_cast %17 : vector<32xf32> to vector<32x1xf32>
    %cst_12 = arith.constant 3.906250e-03 : f32
    %19 = vector.broadcast %cst_12 : f32 to vector<32x1xf32>
    %20 = arith.mulf %18, %19 : vector<32x1xf32>
    %cst_13 = arith.constant dense<0.000000e+00> : vector<8x1xf32>
    %21 = tpu.matmul %6, %20, %cst_13 {dimension_numbers = #tpu.dot_dimension_numbers<[1], [0], [0], [1], [0, 0, 1, 1], [], []>} : vector<8x32xf32>, vector<32x1xf32>, vector<8x1xf32> -> vector<8x1xf32>
    %22 = arith.addf %21, %7 : vector<8x1xf32>
    %c0_14 = arith.constant 0 : index
    %c1 = arith.constant 1 : index
    %23 = vector.load %arg3[%c0_14, %c1] : memref<8x2xf32, #tpu.memory_space<vmem>>, vector<8x1xf32>
    tpu.vector_store %arg3[%c0_14, %c1], %22 {strides = array<i32>} : memref<8x2xf32, #tpu.memory_space<vmem>>, vector<8x1xf32>,
    return
  }
}

</mosaic_0001>

<llo_original>
// kernel: simple_classifier_forward.1
$region0: #{simple_classifier_forward.1}
  #allocation0 [shape = 'u32[]', space=smem, size = 0x4, offset = 0x4, fixed_abs, tag = 'smem constant byte address 0x4 - core index']
  #allocation1 [shape = 'u32[144,128]{1,0:T(1,128)}', space=vmem, size = 0x12000, scoped, tag = 'internal scratch']
  %s0 = inlined_call_operand.vmem [shape: f32[10,512], index: 0, kind: input, shape index: {}]
  %s1 = inlined_call_operand.vmem [shape: f32[32,10], index: 1, kind: input, shape index: {}]
  %s2 = inlined_call_operand.vmem [shape: f32[8,33], index: 2, kind: input, shape index: {}]
  %s3 = inlined_call_operand.vmem [shape: f32[8,2], index: 3, kind: output, shape index: {}]
  %s4 = sld [smem:[#allocation0]]
  $region22: #{simple_classifier_forward.1} parent=0
    _
  %s6 = ssub.s32 1, %s4
  %s7 = scalar_select 0, %s6, %s4
  // Predicated region
  $region2: #{simple_classifier_forward.1} parent=0 // pred_check
    _
  $region3: #{simple_classifier_forward.1} parent=0 // pred_check_branch
    %9 = sbr.rel (0) target = $region5
  $region4: #{simple_classifier_forward.1} parent=0 // pred_region
    _
  $region5: #{simple_classifier_forward.1} parent=0 // pred_fallthru
    _
  // Predicated region
  $region6: #{simple_classifier_forward.1} parent=0 // pred_check
    _
  $region7: #{simple_classifier_forward.1} parent=0 // pred_check_branch
    %11 = sbr.rel (0) target = $region9
  $region8: #{simple_classifier_forward.1} parent=0 // pred_region
    _
  $region9: #{simple_classifier_forward.1} parent=0 // pred_fallthru
    _
  // Predicated region
  $region10: #{simple_classifier_forward.1} parent=0 // pred_check
    _
  $region11: #{simple_classifier_forward.1} parent=0 // pred_check_branch
    %13 = sbr.rel (0) target = $region13
  $region12: #{simple_classifier_forward.1} parent=0 // pred_region
    _
  $region13: #{simple_classifier_forward.1} parent=0 // pred_fallthru
    _
  %v14 = vld [vmem:[%s1] sm:$0xff]
  %v15 = vld [vmem:[%s1 + $0x8] sm:$0xff]
  %v16 = vld [vmem:[%s1 + $0x10] sm:$0xff]
  %v17 = vld [vmem:[%s1 + $0x18] sm:$0xff]
  %v18 = vld [vmem:[%s0] sm:$0xff]
  %v19 = vld [vmem:[%s0 + $0x8] sm:$0xff]
  %v20 = vld [vmem:[%s0 + $0x10] sm:$0xff]
  %v21 = vld [vmem:[%s0 + $0x18] sm:$0xff]
  %v22 = vld [vmem:[%s0 + $0x20] sm:$0x3]
  %v23 = vld [vmem:[%s0 + $0x28] sm:$0x3]
  %v24 = vld [vmem:[%s0 + $0x30] sm:$0x3]
  %v25 = vld [vmem:[%s0 + $0x38] sm:$0x3]
  %vm26 = vcmask 80896
  %v28 = vsel %vm26, %v14, 0
  %v31 = vsel %vm26, %v15, 0
  %v34 = vsel %vm26, %v16, 0
  %v37 = vsel %vm26, %v17, 0
  %vm39 = vcmask 1041408
  %v41 = vsel %vm39, %v22, 0
  %v44 = vsel %vm39, %v23, 0
  %v47 = vsel %vm39, %v24, 0
  %v50 = vsel %vm39, %v25, 0
  %52 = vmatprep.subr.mxu0 0.0
  %53 = vmatpush1.msra.mxu0 0.0
  %54 = vmatprep.subr.mxu0 0.0
  %55 = vmatpush1.msra.mxu0 0.0
  %56 = vmatprep.subr.mxu0 0.0
  %57 = vmatpush1.msra.mxu0 0.0
  %58 = vmatprep.subr.mxu0 0.0
  %59 = vmatpush1.msra.mxu0 0.0
  %60 = vmatprep.subr.mxu0 0.0
  %61 = vmatpush1.msra.mxu0 0.0
  %62 = vmatprep.subr.mxu0 0.0
  %63 = vmatpush1.msra.mxu0 0.0
  %64 = vmatprep.subr.mxu0 0.0
  %65 = vmatpush1.msra.mxu0 0.0
  %66 = vmatprep.subr.mxu0 0.0
  %67 = vmatpush1.msra.mxu0 0.0
  %68 = vmatprep.subr.mxu0 0.0
  %69 = vmatpush1.msra.mxu0 0.0
  %70 = vmatprep.subr.mxu0 0.0
  %71 = vmatpush1.msra.mxu0 0.0
  %72 = vmatprep.subr.mxu0 0.0
  %73 = vmatpush1.msra.mxu0 0.0
  %74 = vmatprep.subr.mxu0 0.0
  %75 = vmatpush1.msra.mxu0 0.0
  %76 = vmatprep.subr.mxu0 0.0
  %77 = vmatpush1.msra.mxu0 0.0
  %78 = vmatprep.subr.mxu0 0.0
  %79 = vmatpush1.msra.mxu0 0.0
  %80 = vmatprep.subr.mxu0 %v44
  %81 = vmatpush1.msra.mxu0 %v41
  %82 = vmatprep.subr.mxu0 %v19
  %83 = vmatpush1.msra.mxu0 %v18
  %84 = vmatprep.subr.mxu0 0.0
  %85 = vmatpush2.msra.mxu0 0.0
  %86 = vmatprep.subr.mxu0 0.0
  %87 = vmatpush2.msra.mxu0 0.0
  %88 = vmatprep.subr.mxu0 0.0
  %89 = vmatpush2.msra.mxu0 0.0
  %90 = vmatprep.subr.mxu0 0.0
  %91 = vmatpush2.msra.mxu0 0.0
  %92 = vmatprep.subr.mxu0 0.0
  %93 = vmatpush2.msra.mxu0 0.0
  %94 = vmatprep.subr.mxu0 0.0
  %95 = vmatpush2.msra.mxu0 0.0
  %96 = vmatprep.subr.mxu0 0.0
  %97 = vmatpush2.msra.mxu0 0.0
  %98 = vmatprep.subr.mxu0 0.0
  %99 = vmatpush2.msra.mxu0 0.0
  %100 = vmatprep.subr.mxu0 0.0
  %101 = vmatpush2.msra.mxu0 0.0
  %102 = vmatprep.subr.mxu0 0.0
  %103 = vmatpush2.msra.mxu0 0.0
  %104 = vmatprep.subr.mxu0 0.0
  %105 = vmatpush2.msra.mxu0 0.0
  %106 = vmatprep.subr.mxu0 0.0
  %107 = vmatpush2.msra.mxu0 0.0
  %108 = vmatprep.subr.mxu0 0.0
  %109 = vmatpush2.msra.mxu0 0.0
  %110 = vmatprep.subr.mxu0 0.0
  %111 = vmatpush2.msra.mxu0 0.0
  %112 = vmatprep.subr.mxu0 0.0
  %113 = vmatpush2.msra.mxu0 0.0
  %114 = vmatprep.subr.mxu0 0.0
  %115 = vmatpush2.msra.mxu0 0.0
  %116 = vmatprep.mubr.f32.mxu0 0.0
  %117 = vmatmul.mubr.f32.gmra.mxu0 %v28
  %v118 = vpop.f32.mrf.mxu0
  %v119 = vadd.f32 0.0, %v118
  %v120 = vpop.f32.mrf.mxu0
  %v121 = vadd.f32 0.0, %v120
  %122 = vmatprep.mubr.f32.mxu0 0.0
  %123 = vmatmul.mubr.f32.gmra.mxu0 %v31
  %v124 = vpop.f32.mrf.mxu0
  %v125 = vadd.f32 0.0, %v124
  %v126 = vpop.f32.mrf.mxu0
  %v127 = vadd.f32 0.0, %v126
  %128 = vmatprep.mubr.f32.mxu0 0.0
  %129 = vmatmul.mubr.f32.gmra.mxu0 %v34
  %v130 = vpop.f32.mrf.mxu0
  %v131 = vadd.f32 0.0, %v130
  %v132 = vpop.f32.mrf.mxu0
  %v133 = vadd.f32 0.0, %v132
  %134 = vmatprep.mubr.f32.mxu0 0.0
  %135 = vmatmul.mubr.f32.gmra.mxu0 %v37
  %v136 = vpop.f32.mrf.mxu0
  %v137 = vadd.f32 0.0, %v136
  %v138 = vpop.f32.mrf.mxu0
  %v139 = vadd.f32 0.0, %v138
  %140 = vdwg.mxu0
  %141 = vmatprep.subr.mxu0 0.0
  %142 = vmatpush1.msra.mxu0 0.0
  %143 = vmatprep.subr.mxu0 0.0
  %144 = vmatpush1.msra.mxu0 0.0
  %145 = vmatprep.subr.mxu0 0.0
  %146 = vmatpush1.msra.mxu0 0.0
  %147 = vmatprep.subr.mxu0 0.0
  %148 = vmatpush1.msra.mxu0 0.0
  %149 = vmatprep.subr.mxu0 0.0
  %150 = vmatpush1.msra.mxu0 0.0
  %151 = vmatprep.subr.mxu0 0.0
  %152 = vmatpush1.msra.mxu0 0.0
  %153 = vmatprep.subr.mxu0 0.0
  %154 = vmatpush1.msra.mxu0 0.0
  %155 = vmatprep.subr.mxu0 0.0
  %156 = vmatpush1.msra.mxu0 0.0
  %157 = vmatprep.subr.mxu0 0.0
  %158 = vmatpush1.msra.mxu0 0.0
  %159 = vmatprep.subr.mxu0 0.0
  %160 = vmatpush1.msra.mxu0 0.0
  %161 = vmatprep.subr.mxu0 0.0
  %162 = vmatpush1.msra.mxu0 0.0
  %163 = vmatprep.subr.mxu0 0.0
  %164 = vmatpush1.msra.mxu0 0.0
  %165 = vmatprep.subr.mxu0 0.0
  %166 = vmatpush1.msra.mxu0 0.0
  %167 = vmatprep.subr.mxu0 0.0
  %168 = vmatpush1.msra.mxu0 0.0
  %169 = vmatprep.subr.mxu0 %v50
  %170 = vmatpush1.msra.mxu0 %v47
  %171 = vmatprep.subr.mxu0 %v21
  %172 = vmatpush1.msra.mxu0 %v20
  %173 = vmatprep.subr.mxu0 0.0
  %174 = vmatpush2.msra.mxu0 0.0
  %175 = vmatprep.subr.mxu0 0.0
  %176 = vmatpush2.msra.mxu0 0.0
  %177 = vmatprep.subr.mxu0 0.0
  %178 = vmatpush2.msra.mxu0 0.0
  %179 = vmatprep.subr.mxu0 0.0
  %180 = vmatpush2.msra.mxu0 0.0
  %181 = vmatprep.subr.mxu0 0.0
  %182 = vmatpush2.msra.mxu0 0.0
  %183 = vmatprep.subr.mxu0 0.0
  %184 = vmatpush2.msra.mxu0 0.0
  %185 = vmatprep.subr.mxu0 0.0
  %186 = vmatpush2.msra.mxu0 0.0
  %187 = vmatprep.subr.mxu0 0.0
  %188 = vmatpush2.msra.mxu0 0.0
  %189 = vmatprep.subr.mxu0 0.0
  %190 = vmatpush2.msra.mxu0 0.0
  %191 = vmatprep.subr.mxu0 0.0
  %192 = vmatpush2.msra.mxu0 0.0
  %193 = vmatprep.subr.mxu0 0.0
  %194 = vmatpush2.msra.mxu0 0.0
  %195 = vmatprep.subr.mxu0 0.0
  %196 = vmatpush2.msra.mxu0 0.0
  %197 = vmatprep.subr.mxu0 0.0
  %198 = vmatpush2.msra.mxu0 0.0
  %199 = vmatprep.subr.mxu0 0.0
  %200 = vmatpush2.msra.mxu0 0.0
  %201 = vmatprep.subr.mxu0 0.0
  %202 = vmatpush2.msra.mxu0 0.0
  %203 = vmatprep.subr.mxu0 0.0
  %204 = vmatpush2.msra.mxu0 0.0
  %205 = vmatprep.mubr.f32.mxu0 0.0
  %206 = vmatmul.mubr.f32.gmra.mxu0 %v28
  %v207 = vpop.f32.mrf.mxu0
  %v208 = vadd.f32 0.0, %v207
  %v209 = vpop.f32.mrf.mxu0
  %v210 = vadd.f32 0.0, %v209
  %211 = vmatprep.mubr.f32.mxu0 0.0
  %212 = vmatmul.mubr.f32.gmra.mxu0 %v31
  %v213 = vpop.f32.mrf.mxu0
  %v214 = vadd.f32 0.0, %v213
  %v215 = vpop.f32.mrf.mxu0
  %v216 = vadd.f32 0.0, %v215
  %217 = vmatprep.mubr.f32.mxu0 0.0
  %218 = vmatmul.mubr.f32.gmra.mxu0 %v34
  %v219 = vpop.f32.mrf.mxu0
  %v220 = vadd.f32 0.0, %v219
  %v221 = vpop.f32.mrf.mxu0
  %v222 = vadd.f32 0.0, %v221
  %223 = vmatprep.mubr.f32.mxu0 0.0
  %224 = vmatmul.mubr.f32.gmra.mxu0 %v37
  %v225 = vpop.f32.mrf.mxu0
  %v226 = vadd.f32 0.0, %v225
  %v227 = vpop.f32.mrf.mxu0
  %v228 = vadd.f32 0.0, %v227
  %229 = vdwg.mxu0
  %v230 = vmax.f32 %v119, 0.0
  %v231 = vmax.f32 %v121, 0.0
  %v232 = vmax.f32 %v208, 0.0
  %v233 = vmax.f32 %v210, 0.0
  %v234 = vmax.f32 %v125, 0.0
  %v235 = vmax.f32 %v127, 0.0
  %v236 = vmax.f32 %v214, 0.0
  %v237 = vmax.f32 %v216, 0.0
  %v238 = vmax.f32 %v131, 0.0
  %v239 = vmax.f32 %v133, 0.0
  %v240 = vmax.f32 %v220, 0.0
  %v241 = vmax.f32 %v222, 0.0
  %v242 = vmax.f32 %v137, 0.0
  %v243 = vmax.f32 %v139, 0.0
  %v244 = vmax.f32 %v226, 0.0
  %v245 = vmax.f32 %v228, 0.0
  %v246 = vld [vmem:[%s2] sm:$0xff]
  %v247 = vadd.f32 %v230, %v231
  %248 = vadd.xlane.f32.xlu0 %v247
  %v249 = vpop.xlane.xlu0 %248
  %v250 = vadd.f32 %v234, %v235
  %251 = vadd.xlane.f32.xlu0 %v250
  %v252 = vpop.xlane.xlu0 %251
  %v253 = vadd.f32 %v238, %v239
  %254 = vadd.xlane.f32.xlu0 %v253
  %v255 = vpop.xlane.xlu0 %254
  %v256 = vadd.f32 %v242, %v243
  %257 = vadd.xlane.f32.xlu0 %v256
  %v258 = vpop.xlane.xlu0 %257
  %v259 = vmul.f32 %v249, 0.00390625
  %v260 = vmul.f32 %v252, 0.00390625
  %v261 = vmul.f32 %v255, 0.00390625
  %v262 = vmul.f32 %v258, 0.00390625
  %264 = vrot.lane.b32.xlu0 %v246, 96
  %v265 = vpop.permute.xlu0 %264
  %vm267 = vcmask 261120
  %v268 = vsel %vm267, %v246, 0
  %270 = vmatprep.subr.mxu0 0.0
  %271 = vmatpush1.msra.mxu0 0.0
  %272 = vmatprep.subr.mxu0 0.0
  %273 = vmatpush1.msra.mxu0 0.0
  %274 = vmatprep.subr.mxu0 0.0
  %275 = vmatpush1.msra.mxu0 0.0
  %276 = vmatprep.subr.mxu0 0.0
  %277 = vmatpush1.msra.mxu0 0.0
  %278 = vmatprep.subr.mxu0 0.0
  %279 = vmatpush1.msra.mxu0 0.0
  %280 = vmatprep.subr.mxu0 0.0
  %281 = vmatpush1.msra.mxu0 0.0
  %282 = vmatprep.subr.mxu0 0.0
  %283 = vmatpush1.msra.mxu0 0.0
  %284 = vmatprep.subr.mxu0 0.0
  %285 = vmatpush1.msra.mxu0 0.0
  %286 = vmatprep.subr.mxu0 0.0
  %287 = vmatpush1.msra.mxu0 0.0
  %288 = vmatprep.subr.mxu0 0.0
  %289 = vmatpush1.msra.mxu0 0.0
  %290 = vmatprep.subr.mxu0 0.0
  %291 = vmatpush1.msra.mxu0 0.0
  %292 = vmatprep.subr.mxu0 0.0
  %293 = vmatpush1.msra.mxu0 0.0
  %294 = vmatprep.subr.mxu0 0.0
  %295 = vmatpush1.msra.mxu0 %v262
  %296 = vmatprep.subr.mxu0 0.0
  %297 = vmatpush1.msra.mxu0 %v261
  %298 = vmatprep.subr.mxu0 0.0
  %299 = vmatpush1.msra.mxu0 %v260
  %300 = vmatprep.subr.mxu0 0.0
  %301 = vmatpush1.msra.mxu0 %v259
  %302 = vmatprep.subr.mxu0 0.0
  %303 = vmatpush2.msra.mxu0 0.0
  %304 = vmatprep.subr.mxu0 0.0
  %305 = vmatpush2.msra.mxu0 0.0
  %306 = vmatprep.subr.mxu0 0.0
  %307 = vmatpush2.msra.mxu0 0.0
  %308 = vmatprep.subr.mxu0 0.0
  %309 = vmatpush2.msra.mxu0 0.0
  %310 = vmatprep.subr.mxu0 0.0
  %311 = vmatpush2.msra.mxu0 0.0
  %312 = vmatprep.subr.mxu0 0.0
  %313 = vmatpush2.msra.mxu0 0.0
  %314 = vmatprep.subr.mxu0 0.0
  %315 = vmatpush2.msra.mxu0 0.0
  %316 = vmatprep.subr.mxu0 0.0
  %317 = vmatpush2.msra.mxu0 0.0
  %318 = vmatprep.subr.mxu0 0.0
  %319 = vmatpush2.msra.mxu0 0.0
  %320 = vmatprep.subr.mxu0 0.0
  %321 = vmatpush2.msra.mxu0 0.0
  %322 = vmatprep.subr.mxu0 0.0
  %323 = vmatpush2.msra.mxu0 0.0
  %324 = vmatprep.subr.mxu0 0.0
  %325 = vmatpush2.msra.mxu0 0.0
  %326 = vmatprep.subr.mxu0 0.0
  %327 = vmatpush2.msra.mxu0 0.0
  %328 = vmatprep.subr.mxu0 0.0
  %329 = vmatpush2.msra.mxu0 0.0
  %330 = vmatprep.subr.mxu0 0.0
  %331 = vmatpush2.msra.mxu0 0.0
  %332 = vmatprep.subr.mxu0 0.0
  %333 = vmatpush2.msra.mxu0 0.0
  %334 = vmatprep.mubr.f32.mxu0 0.0
  %335 = vmatmul.mubr.f32.gmra.mxu0 %v268
  %v336 = vpop.f32.mrf.mxu0
  %v337 = vadd.f32 %v265, %v336
  %v338 = vpop.f32.mrf.mxu0
  %339 = vdwg.mxu0
  %vm340 = vcmask 7168
  %341 = vst.msk [vmem:[%s3] sm:$0xff] %vm340, %v337
  %v342 = vadd.f32 %v232, %v233
  %343 = vadd.xlane.f32.xlu0 %v342
  %v344 = vpop.xlane.xlu0 %343
  %v345 = vadd.f32 %v236, %v237
  %346 = vadd.xlane.f32.xlu0 %v345
  %v347 = vpop.xlane.xlu0 %346
  %v348 = vadd.f32 %v240, %v241
  %349 = vadd.xlane.f32.xlu0 %v348
  %v350 = vpop.xlane.xlu0 %349
  %v351 = vadd.f32 %v244, %v245
  %352 = vadd.xlane.f32.xlu0 %v351
  %v353 = vpop.xlane.xlu0 %352
  %v354 = vmul.f32 %v344, 0.00390625
  %v355 = vmul.f32 %v347, 0.00390625
  %v356 = vmul.f32 %v350, 0.00390625
  %v357 = vmul.f32 %v353, 0.00390625
  %358 = vmatprep.subr.mxu0 0.0
  %359 = vmatpush1.msra.mxu0 0.0
  %360 = vmatprep.subr.mxu0 0.0
  %361 = vmatpush1.msra.mxu0 0.0
  %362 = vmatprep.subr.mxu0 0.0
  %363 = vmatpush1.msra.mxu0 0.0
  %364 = vmatprep.subr.mxu0 0.0
  %365 = vmatpush1.msra.mxu0 0.0
  %366 = vmatprep.subr.mxu0 0.0
  %367 = vmatpush1.msra.mxu0 0.0
  %368 = vmatprep.subr.mxu0 0.0
  %369 = vmatpush1.msra.mxu0 0.0
  %370 = vmatprep.subr.mxu0 0.0
  %371 = vmatpush1.msra.mxu0 0.0
  %372 = vmatprep.subr.mxu0 0.0
  %373 = vmatpush1.msra.mxu0 0.0
  %374 = vmatprep.subr.mxu0 0.0
  %375 = vmatpush1.msra.mxu0 0.0
  %376 = vmatprep.subr.mxu0 0.0
  %377 = vmatpush1.msra.mxu0 0.0
  %378 = vmatprep.subr.mxu0 0.0
  %379 = vmatpush1.msra.mxu0 0.0
  %380 = vmatprep.subr.mxu0 0.0
  %381 = vmatpush1.msra.mxu0 0.0
  %382 = vmatprep.subr.mxu0 0.0
  %383 = vmatpush1.msra.mxu0 %v357
  %384 = vmatprep.subr.mxu0 0.0
  %385 = vmatpush1.msra.mxu0 %v356
  %386 = vmatprep.subr.mxu0 0.0
  %387 = vmatpush1.msra.mxu0 %v355
  %388 = vmatprep.subr.mxu0 0.0
  %389 = vmatpush1.msra.mxu0 %v354
  %390 = vmatprep.subr.mxu0 0.0
  %391 = vmatpush2.msra.mxu0 0.0
  %392 = vmatprep.subr.mxu0 0.0
  %393 = vmatpush2.msra.mxu0 0.0
  %394 = vmatprep.subr.mxu0 0.0
  %395 = vmatpush2.msra.mxu0 0.0
  %396 = vmatprep.subr.mxu0 0.0
  %397 = vmatpush2.msra.mxu0 0.0
  %398 = vmatprep.subr.mxu0 0.0
  %399 = vmatpush2.msra.mxu0 0.0
  %400 = vmatprep.subr.mxu0 0.0
  %401 = vmatpush2.msra.mxu0 0.0
  %402 = vmatprep.subr.mxu0 0.0
  %403 = vmatpush2.msra.mxu0 0.0
  %404 = vmatprep.subr.mxu0 0.0
  %405 = vmatpush2.msra.mxu0 0.0
  %406 = vmatprep.subr.mxu0 0.0
  %407 = vmatpush2.msra.mxu0 0.0
  %408 = vmatprep.subr.mxu0 0.0
  %409 = vmatpush2.msra.mxu0 0.0
  %410 = vmatprep.subr.mxu0 0.0
  %411 = vmatpush2.msra.mxu0 0.0
  %412 = vmatprep.subr.mxu0 0.0
  %413 = vmatpush2.msra.mxu0 0.0
  %414 = vmatprep.subr.mxu0 0.0
  %415 = vmatpush2.msra.mxu0 0.0
  %416 = vmatprep.subr.mxu0 0.0
  %417 = vmatpush2.msra.mxu0 0.0
  %418 = vmatprep.subr.mxu0 0.0
  %419 = vmatpush2.msra.mxu0 0.0
  %420 = vmatprep.subr.mxu0 0.0
  %421 = vmatpush2.msra.mxu0 0.0
  %422 = vmatprep.mubr.f32.mxu0 0.0
  %423 = vmatmul.mubr.f32.gmra.mxu0 %v268
  %v424 = vpop.f32.mrf.mxu0
  %v425 = vadd.f32 %v265, %v424
  %v426 = vpop.f32.mrf.mxu0
  %427 = vdwg.mxu0
  %429 = vrot.lane.b32.xlu0 %v425, 1
  %v430 = vpop.permute.xlu0 %429
  %vm432 = vcmask 15368
  %433 = vst.msk [vmem:[%s3] sm:$0xff] %vm432, %v430
  // Predicated region
  $region14: #{simple_classifier_forward.1} parent=0 // pred_check
    _
  $region15: #{simple_classifier_forward.1} parent=0 // pred_check_branch
    %435 = sbr.rel (0) target = $region17
  $region16: #{simple_classifier_forward.1} parent=0 // pred_region
    _
  $region17: #{simple_classifier_forward.1} parent=0 // pred_fallthru
    _
  // Predicated region
  $region18: #{simple_classifier_forward.1} parent=0 // pred_check
    _
  $region19: #{simple_classifier_forward.1} parent=0 // pred_check_branch
    %437 = sbr.rel (0) target = $region21
  $region20: #{simple_classifier_forward.1} parent=0 // pred_region
    _
  $region21: #{simple_classifier_forward.1} parent=0 // pred_fallthru
    _

</llo_original>
